<compile_context>
chip_gen: v5e
topology: v5e:2x2
jax: 0.10.0
libtpu: 0.0.40
codegen_flags: <defaults>
</compile_context>

<pallas_src>
import jax
import jax.numpy as jnp
from jax.experimental import pallas as pl
from jax.experimental.pallas import tpu as pltpu


_LANE_CANDIDATES = (2048, 1024, 512, 256, 128)   # lane-dense widths (mult. of 128)
_TARGET_TILE_BYTES = 8 << 20                     # ~8 MiB per grid step


def _h_sigmoid_kernel(x_ref, o_ref):
    # Compute in f32 regardless of input dtype (free: kernel is HBM-bound and
    # no VLIW slot is near saturation), then cast back to the I/O dtype.
    v = x_ref[...].astype(jnp.float32)
    o_ref[...] = (jnp.clip(v + 3.0, 0.0, 6.0) / 6.0).astype(o_ref.dtype)


def _h_sigmoid_jnp(x):
    # Plain-JAX epilogue for a < 128-element ragged remainder.
    v = x.astype(jnp.float32)
    return (jnp.clip(v + 3.0, 0.0, 6.0) / 6.0).astype(x.dtype)


def _round_up(a, m):
    return ((a + m - 1) // m) * m


def _vmem_cap_bytes():
    """Physical per-core VMEM; conservative fallback is v7x's 64 MiB."""
    try:
        return int(pltpu.get_tpu_info().vmem_capacity_bytes)
    except Exception:
        return 64 << 20


def _h_sigmoid_2d(x2d):
    """Lane-dense (rows, lanes) slab -> h_sigmoid via one pallas_call."""
    rows, lanes = x2d.shape
    dtype = x2d.dtype
    itemsize = jnp.dtype(dtype).itemsize
    sub = max(8, 32 // itemsize)          # native sublane packing: 8/16/32 rows
    row_bytes = lanes * itemsize

    # ~8 MiB tiles, rounded to the sublane multiple, never exceeding the
    # (sublane-rounded) total row count.
    block_rows = max(sub, (_TARGET_TILE_BYTES // row_bytes) // sub * sub)
    block_rows = min(block_rows, _round_up(rows, sub))
    # Ensure >=2 grid steps on multi-MiB inputs so v7x's two TensorCores both
    # stream (harmless on single-TC v5e/v6e; skipped for small inputs).
    if pl.cdiv(rows, block_rows) < 2 and rows * row_bytes >= (4 << 20):
        block_rows = _round_up(pl.cdiv(rows, 2), sub)

    grid = (pl.cdiv(rows, block_rows),)   # ragged last block handled by Pallas

    tile_bytes = block_rows * row_bytes
    # in + out, double-buffered, plus slack; generation-aware ceiling
    # (~40 MiB on v7x, 64 MiB on v5e/v6e's 128 MiB VMEM).
    cap = min((_vmem_cap_bytes() * 5) // 8, 64 << 20)
    vmem_limit = int(min(max(4 * tile_bytes + (2 << 20), 8 << 20), cap))

    # TODO(synk): if callers can donate the input, add input_output_aliases={0: 0}.
    return pl.pallas_call(
        _h_sigmoid_kernel,
        out_shape=jax.ShapeDtypeStruct((rows, lanes), dtype),
        grid=grid,
        in_specs=[pl.BlockSpec((block_rows, lanes), lambda i: (i, 0))],
        out_specs=pl.BlockSpec((block_rows, lanes), lambda i: (i, 0)),
        compiler_params=pltpu.CompilerParams(
            dimension_semantics=("parallel",),
            vmem_limit_bytes=vmem_limit,
        ),
    )(x2d)


def h_sigmoid(x):
    """Elementwise ReLU6(x + 3) / 6 (PyTorch h_sigmoid) via Pallas on TPU."""
    orig_shape = x.shape
    n = x.size
    flat = x.reshape(-1)                  # bitcast for contiguous inputs (free)

    # Widest lane count (multiple of 128) that divides n; otherwise 128 + tail.
    lanes = next((L for L in _LANE_CANDIDATES if n % L == 0), 128)

    if n % lanes == 0:
        # Aligned path (the common case): zero extra HBM copies.
        out2d = _h_sigmoid_2d(flat.reshape(n // lanes, lanes))
        return out2d.reshape(orig_shape)

    # Misaligned path: aligned prefix through the kernel, < 128-element
    # remainder via a tiny jnp epilogue (avoids whole-array pad + re-slice).
    n_main = (n // lanes) * lanes
    if n_main == 0:
        # Degenerate input (< 128 elements): not worth a kernel launch.
        return _h_sigmoid_jnp(flat).reshape(orig_shape)
    head = _h_sigmoid_2d(flat[:n_main].reshape(n_main // lanes, lanes)).reshape(-1)
    tail = _h_sigmoid_jnp(flat[n_main:])
    return jnp.concatenate([head, tail]).reshape(orig_shape)


def _reference(x):
    # Pure-JAX mirror of PyTorch h_sigmoid: ReLU6(x + 3) / 6.
    return jnp.clip(x + 3.0, 0.0, 6.0) / 6.0


if __name__ == "__main__":
    B, C, H, W = 2, 4, 16, 16
    key = jax.random.PRNGKey(0)
    x = jax.random.normal(key, (B, C, H, W), jnp.float32) * 4.0

    out = jax.block_until_ready(h_sigmoid(x))
    assert out.shape == x.shape, out.shape
    assert out.dtype == x.dtype, out.dtype

    ref = jax.block_until_ready(_reference(x))
    err = float(jnp.max(jnp.abs(out - ref)))
    assert err <= 1e-6, f"mismatch: max abs err {err}"

    # Unaligned shape: exercises kernel-prefix + jnp-tail path (no full pad).
    x2 = jax.random.normal(jax.random.PRNGKey(1), (3, 5, 17, 31), jnp.float32) * 4.0
    out2 = jax.block_until_ready(h_sigmoid(x2))
    err2 = float(jnp.max(jnp.abs(out2 - _reference(x2))))
    assert err2 <= 1e-6, f"mismatch: max abs err {err2}"

    print("KERNEL_OK")
</pallas_src>

<mosaic_0001>
module attributes {stable_mosaic.version = 11 : i64} {
  func.func @_h_sigmoid_kernel(%arg0: i32, %arg1: memref<8x2048xf32, #tpu.memory_space<vmem>>, %arg2: memref<8x2048xf32, #tpu.memory_space<vmem>>) attributes {dimension_semantics = [#tpu.dimension_semantics<parallel>], iteration_bounds = array<i64: 1>, scalar_prefetch = 0 : i64, scratch_operands = 0 : i64, tpu.core_type = #tpu.core_type<tc>, window_params = [{transform_indices = @transform_0, window_bounds = array<i64: 8, 2048>}, {transform_indices = @transform_1, window_bounds = array<i64: 8, 2048>}]} {
    %c0 = arith.constant 0 : index
    %c0_0 = arith.constant 0 : index
    %0 = vector.load %arg1[%c0, %c0_0] : memref<8x2048xf32, #tpu.memory_space<vmem>>, vector<8x2048xf32>
    %cst = arith.constant 3.000000e+00 : f32
    %1 = vector.broadcast %cst : f32 to vector<8x2048xf32>
    %2 = arith.addf %0, %1 : vector<8x2048xf32>
    %cst_1 = arith.constant 0.000000e+00 : f32
    %cst_2 = arith.constant 6.000000e+00 : f32
    %3 = vector.broadcast %cst_1 : f32 to vector<8x2048xf32>
    %4 = arith.maximumf %3, %2 : vector<8x2048xf32>
    %5 = vector.broadcast %cst_2 : f32 to vector<8x2048xf32>
    %6 = arith.minimumf %5, %4 : vector<8x2048xf32>
    %cst_3 = arith.constant 6.000000e+00 : f32
    %7 = vector.broadcast %cst_3 : f32 to vector<8x2048xf32>
    %8 = arith.divf %6, %7 : vector<8x2048xf32>
    %c0_4 = arith.constant 0 : index
    %c0_5 = arith.constant 0 : index
    %9 = vector.load %arg2[%c0_4, %c0_5] : memref<8x2048xf32, #tpu.memory_space<vmem>>, vector<8x2048xf32>
    tpu.vector_store %arg2[%c0_4, %c0_5], %8 {strides = array<i32>} : memref<8x2048xf32, #tpu.memory_space<vmem>>, vector<8x2048xf32>,
    return
  }
  func.func @transform_0(%arg0: i32) -> (i32, i32) {
    %c0_i32 = arith.constant 0 : i32
    %c0_i32_0 = arith.constant 0 : i32
    return %arg0, %c0_i32 : i32, i32
  }
  func.func @transform_1(%arg0: i32) -> (i32, i32) {
    %c0_i32 = arith.constant 0 : i32
    %c0_i32_0 = arith.constant 0 : i32
    return %arg0, %c0_i32 : i32, i32
  }
}

</mosaic_0001>

<llo_original>
// kernel: tpu_custom_call.1
$region0: #{tpu_custom_call.1}
  #allocation0 [shape = 'u32[]', space=smem, size = 0x4, offset = 0x4, fixed_abs, tag = 'smem constant byte address 0x4 - core index']
  #allocation1 [shape = 'u32[72,128]{1,0:T(1,128)}', space=vmem, size = 0x9000, scoped, tag = 'internal scratch']
  %s0 = inlined_call_operand.hbm [shape: f32[1,2048], index: 0, kind: input, shape index: {}]
  %s1 = inlined_call_operand.hbm [shape: f32[1,2048], index: 1, kind: output, shape index: {}]
  %s2 = sld [smem:[#allocation0]]
  $region18: #{tpu_custom_call.1} parent=0
    _
  %s4 = ssub.s32 1, %s2
  %s5 = scalar_select 0, %s4, %s2
  $region1: #{tpu_custom_call.1} parent=0
    #allocation2 [shape = 'u8[65536]{0}', space=vmem, size = 0x10000, scoped, tag = 'input window, operand 0, single buffered']
    #allocation3 [shape = 's32[1]{0}', space=sflag, size = 0x4, scoped, tag = 'scoped memory for tpu_custom_call.1']
    #allocation4 [shape = 's32[1]{0}', space=sflag, size = 0x4, scoped, tag = 'scoped memory for tpu_custom_call.1']
    #allocation5 [shape = 'u8[65536]{0}', space=vmem, size = 0x10000, scoped, tag = 'output window, operand 0, single buffered']
    %6 = vsyncpa [#allocation3], 0
    %7 = vsyncpa [#allocation4], 0
    // Predicated region
    $region2: #{tpu_custom_call.1} parent=1 // pred_check
      _
    $region3: #{tpu_custom_call.1} parent=1 // pred_check_branch
      %9 = sbr.rel (0) target = $region5
    $region4: #{tpu_custom_call.1} parent=1 // pred_region
      %11 = vsyncadd [#allocation3], 1792
      %s12 = sshll.u32 %s0, 4
      %s13 = int_to_ptr.hbm [resolvable:$true] %s12
      %s14 = sshll.u32 [#allocation2], 4
      %s15 = int_to_ptr.vmem [resolvable:$true] %s14
      %20 = dma.hbm_to_vmem [thread:$0]  %s13, 256, %s15, [#allocation3], 256, 256, 16
    $region5: #{tpu_custom_call.1} parent=1 // pred_fallthru
      _
    // Predicated region
    $region6: #{tpu_custom_call.1} parent=1 // pred_check
      _
    $region7: #{tpu_custom_call.1} parent=1 // pred_check_branch
      %22 = sbr.rel (0) target = $region9
    $region8: #{tpu_custom_call.1} parent=1 // pred_region
      %24 = dma.done [#allocation3], 2048
    $region9: #{tpu_custom_call.1} parent=1 // pred_fallthru
      _
    %v25 = vld [vmem:[#allocation2] sm:$0xff]
    %v26 = vld [vmem:[#allocation2 + $0x8] sm:$0xff]
    %v27 = vld [vmem:[#allocation2 + $0x10] sm:$0xff]
    %v28 = vld [vmem:[#allocation2 + $0x18] sm:$0xff]
    %v29 = vld [vmem:[#allocation2 + $0x20] sm:$0xff]
    %v30 = vld [vmem:[#allocation2 + $0x28] sm:$0xff]
    %v31 = vld [vmem:[#allocation2 + $0x30] sm:$0xff]
    %v32 = vld [vmem:[#allocation2 + $0x38] sm:$0xff]
    %v33 = vld [vmem:[#allocation2 + $0x40] sm:$0xff]
    %v34 = vld [vmem:[#allocation2 + $0x48] sm:$0xff]
    %v35 = vld [vmem:[#allocation2 + $0x50] sm:$0xff]
    %v36 = vld [vmem:[#allocation2 + $0x58] sm:$0xff]
    %v37 = vld [vmem:[#allocation2 + $0x60] sm:$0xff]
    %v38 = vld [vmem:[#allocation2 + $0x68] sm:$0xff]
    %v39 = vld [vmem:[#allocation2 + $0x70] sm:$0xff]
    %v40 = vld [vmem:[#allocation2 + $0x78] sm:$0xff]
    %v41 = vadd.f32 %v25, 3.0
    %v42 = vadd.f32 %v26, 3.0
    %v43 = vadd.f32 %v27, 3.0
    %v44 = vadd.f32 %v28, 3.0
    %v45 = vadd.f32 %v29, 3.0
    %v46 = vadd.f32 %v30, 3.0
    %v47 = vadd.f32 %v31, 3.0
    %v48 = vadd.f32 %v32, 3.0
    %v49 = vadd.f32 %v33, 3.0
    %v50 = vadd.f32 %v34, 3.0
    %v51 = vadd.f32 %v35, 3.0
    %v52 = vadd.f32 %v36, 3.0
    %v53 = vadd.f32 %v37, 3.0
    %v54 = vadd.f32 %v38, 3.0
    %v55 = vadd.f32 %v39, 3.0
    %v56 = vadd.f32 %v40, 3.0
    %v57 = vmax.f32 %v41, 0.0
    %v58 = vmax.f32 %v42, 0.0
    %v59 = vmax.f32 %v43, 0.0
    %v60 = vmax.f32 %v44, 0.0
    %v61 = vmax.f32 %v45, 0.0
    %v62 = vmax.f32 %v46, 0.0
    %v63 = vmax.f32 %v47, 0.0
    %v64 = vmax.f32 %v48, 0.0
    %v65 = vmax.f32 %v49, 0.0
    %v66 = vmax.f32 %v50, 0.0
    %v67 = vmax.f32 %v51, 0.0
    %v68 = vmax.f32 %v52, 0.0
    %v69 = vmax.f32 %v53, 0.0
    %v70 = vmax.f32 %v54, 0.0
    %v71 = vmax.f32 %v55, 0.0
    %v72 = vmax.f32 %v56, 0.0
    %v73 = vmin.f32 %v57, 6.0
    %v74 = vmin.f32 %v58, 6.0
    %v75 = vmin.f32 %v59, 6.0
    %v76 = vmin.f32 %v60, 6.0
    %v77 = vmin.f32 %v61, 6.0
    %v78 = vmin.f32 %v62, 6.0
    %v79 = vmin.f32 %v63, 6.0
    %v80 = vmin.f32 %v64, 6.0
    %v81 = vmin.f32 %v65, 6.0
    %v82 = vmin.f32 %v66, 6.0
    %v83 = vmin.f32 %v67, 6.0
    %v84 = vmin.f32 %v68, 6.0
    %v85 = vmin.f32 %v69, 6.0
    %v86 = vmin.f32 %v70, 6.0
    %v87 = vmin.f32 %v71, 6.0
    %v88 = vmin.f32 %v72, 6.0
    %v89 = vrcp.pop 6.0
    %v90 = vmul.f32 6.0, %v89
    %v91 = vsub.f32 1.0, %v90
    %v92 = vmul.f32 %v89, %v91
    %v93 = vadd.f32 %v89, %v92
    %vm94 = vweird.f32 %v89
    %v95 = vsel %vm94, %v89, %v93
    %v96 = vmul.f32 %v73, %v95
    %v97 = vmul.f32 %v74, %v95
    %v98 = vmul.f32 %v75, %v95
    %v99 = vmul.f32 %v76, %v95
    %v100 = vmul.f32 %v77, %v95
    %v101 = vmul.f32 %v78, %v95
    %v102 = vmul.f32 %v79, %v95
    %v103 = vmul.f32 %v80, %v95
    %v104 = vmul.f32 %v81, %v95
    %v105 = vmul.f32 %v82, %v95
    %v106 = vmul.f32 %v83, %v95
    %v107 = vmul.f32 %v84, %v95
    %v108 = vmul.f32 %v85, %v95
    %v109 = vmul.f32 %v86, %v95
    %v110 = vmul.f32 %v87, %v95
    %v111 = vmul.f32 %v88, %v95
    %112 = vst [vmem:[#allocation5] sm:$0xff] %v96
    %113 = vst [vmem:[#allocation5 + $0x8] sm:$0xff] %v97
    %114 = vst [vmem:[#allocation5 + $0x10] sm:$0xff] %v98
    %115 = vst [vmem:[#allocation5 + $0x18] sm:$0xff] %v99
    %116 = vst [vmem:[#allocation5 + $0x20] sm:$0xff] %v100
    %117 = vst [vmem:[#allocation5 + $0x28] sm:$0xff] %v101
    %118 = vst [vmem:[#allocation5 + $0x30] sm:$0xff] %v102
    %119 = vst [vmem:[#allocation5 + $0x38] sm:$0xff] %v103
    %120 = vst [vmem:[#allocation5 + $0x40] sm:$0xff] %v104
    %121 = vst [vmem:[#allocation5 + $0x48] sm:$0xff] %v105
    %122 = vst [vmem:[#allocation5 + $0x50] sm:$0xff] %v106
    %123 = vst [vmem:[#allocation5 + $0x58] sm:$0xff] %v107
    %124 = vst [vmem:[#allocation5 + $0x60] sm:$0xff] %v108
    %125 = vst [vmem:[#allocation5 + $0x68] sm:$0xff] %v109
    %126 = vst [vmem:[#allocation5 + $0x70] sm:$0xff] %v110
    %127 = vst [vmem:[#allocation5 + $0x78] sm:$0xff] %v111
    // Predicated region
    $region10: #{tpu_custom_call.1} parent=1 // pred_check
      _
    $region11: #{tpu_custom_call.1} parent=1 // pred_check_branch
      %129 = sbr.rel (0) target = $region13
    $region12: #{tpu_custom_call.1} parent=1 // pred_region
      %131 = vsyncadd [#allocation4], 1792
      %s132 = sshll.u32 [#allocation5], 4
      %s133 = int_to_ptr.vmem [resolvable:$true] %s132
      %s134 = sshll.u32 %s1, 4
      %s135 = int_to_ptr.hbm [resolvable:$true] %s134
      %140 = dma.vmem_to_hbm [thread:$0]  %s133, 256, %s135, [#allocation4], 256, 256, 16
    $region13: #{tpu_custom_call.1} parent=1 // pred_fallthru
      _
    // Predicated region
    $region14: #{tpu_custom_call.1} parent=1 // pred_check
      _
    $region15: #{tpu_custom_call.1} parent=1 // pred_check_branch
      %142 = sbr.rel (0) target = $region17
    $region16: #{tpu_custom_call.1} parent=1 // pred_region
      %144 = dma.done [#allocation4], 2048
    $region17: #{tpu_custom_call.1} parent=1 // pred_fallthru
      _
    %145 = vsyncpa [#allocation3], 1
    %146 = vsyncpa [#allocation4], 1

</llo_original>
